<compile_context>
chip_gen: v5e
topology: v5e:2x2
jax: 0.10.0
libtpu: 0.0.40
codegen_flags: <defaults>
</compile_context>

<pallas_src>
import functools

import jax
import jax.numpy as jnp
import numpy as np
from jax.experimental import pallas as pl
from jax.experimental.pallas import tpu as pltpu


def _round_up(x, m):
    return (x + m - 1) // m * m


def gru_chunk_kernel(xg_ref, whh_ref, bhn_ref, out_ref, h_ref, *, ts, hp):
    """One (batch-block, time-chunk) grid step of the GRU recurrence.

    xg_ref : (TS, BB, 3*Hp) bf16  input-side gate pre-activations (r,z,n order,
                                  r/z hidden biases folded in).
    whh_ref: (Hp, 3*Hp)     bf16  gate-concatenated hidden weights (h @ W).
    bhn_ref: (1, Hp)        f32   hidden-side n-gate bias (gated by r, cannot
                                  be folded into xg).
    out_ref: (BB, Hp)       f32   final hidden state (resident across time).
    h_ref  : (BB, Hp)       f32   VMEM scratch carrying h across time chunks.
    """
    t = pl.program_id(1)
    nt = pl.num_programs(1)
    bb = out_ref.shape[0]

    @pl.when(t == 0)
    def _():
        h_ref[...] = jnp.zeros_like(h_ref)

    # Hoist the n-gate bias broadcast out of the unrolled time loop
    # (JAX does not CSE broadcast_in_dim).
    bhn_b = jnp.broadcast_to(bhn_ref[...], (bb, hp))
    whh = whh_ref[...]                                           # bf16 (Hp,3Hp)

    def step(i, h):
        xg = xg_ref[i].astype(jnp.float32)                       # (BB, 3Hp)
        hg = jnp.dot(h.astype(jnp.bfloat16), whh,
                     preferred_element_type=jnp.float32)         # (BB, 3Hp)
        r = jax.nn.sigmoid(xg[:, :hp] + hg[:, :hp])
        z = jax.nn.sigmoid(xg[:, hp:2 * hp] + hg[:, hp:2 * hp])
        n = jnp.tanh(xg[:, 2 * hp:] + r * (hg[:, 2 * hp:] + bhn_b))
        return n + z * (h - n)                                   # == (1-z)n + z h

    h_ref[...] = jax.lax.fori_loop(0, ts, step, h_ref[...],
                                   unroll=min(ts, 8))

    @pl.when(t == nt - 1)
    def _():
        out_ref[...] = h_ref[...]


def gru_final_hidden(xg, whh_bf16, bhn, *, bb, ts):
    """Streamed GRU recurrence; returns the padded final hidden state (Bp, Hp)."""
    Sp, Bp, H3 = xg.shape
    Hp = H3 // 3
    nb = Bp // bb
    nt = Sp // ts

    kernel = functools.partial(gru_chunk_kernel, ts=ts, hp=Hp)

    # VMEM budget: double-buffered xg chunk + weights + out + h scratch + slack.
    chunk_bytes = ts * bb * H3 * 2            # bf16 xg chunk
    w_bytes = Hp * H3 * 2 + 8 * Hp * 4        # W_hh (bf16) + padded bhn
    out_bytes = bb * Hp * 4
    vmem_limit = int(min(100 * 1024 * 1024,
                         4 * chunk_bytes + 2 * w_bytes + 6 * out_bytes
                         + (16 << 20)))

    return pl.pallas_call(
        kernel,
        out_shape=jax.ShapeDtypeStruct((Bp, Hp), jnp.float32),
        grid_spec=pltpu.PrefetchScalarGridSpec(
            num_scalar_prefetch=0,
            grid=(nb, nt),
            in_specs=[
                pl.BlockSpec((ts, bb, H3), lambda b, t: (t, b, 0)),   # xg chunk
                pl.BlockSpec((Hp, H3), lambda b, t: (0, 0)),          # W_hh
                pl.BlockSpec((1, Hp), lambda b, t: (0, 0)),           # b_hn
            ],
            out_specs=pl.BlockSpec((bb, Hp), lambda b, t: (b, 0)),
            scratch_shapes=[pltpu.VMEM((bb, Hp), jnp.float32)],
        ),
        compiler_params=pltpu.CompilerParams(
            dimension_semantics=("parallel", "arbitrary"),
            vmem_limit_bytes=vmem_limit,
        ),
    )(xg, whh_bf16, bhn)


def _prepare_gru_params(w_ih, w_hh, b_ih, b_hh, Hp):
    """Gate-concatenate, pad to lane-dense (Hp, 3Hp), fold r/z hidden biases.

    Inputs use the per-gate pre-transposed layout:
      w_ih, w_hh : (3, H, H), gate order (r, z, n), applied as x @ w[g]
      b_ih, b_hh : (3, 1, H)
    """
    H = w_ih.shape[-1]
    f32 = jnp.float32
    wih_all = jnp.zeros((Hp, 3 * Hp), f32)
    whh_all = jnp.zeros((Hp, 3 * Hp), f32)
    for g in range(3):
        wih_all = wih_all.at[:H, g * Hp:g * Hp + H].set(w_ih[g].astype(f32))
        whh_all = whh_all.at[:H, g * Hp:g * Hp + H].set(w_hh[g].astype(f32))
    # x-side bias: b_ih for every gate, plus b_hh for r and z (additive);
    # the n-gate hidden bias is gated by r so it stays separate.
    bx = jnp.zeros((1, 3 * Hp), f32)
    bx = bx.at[0, 0 * Hp:0 * Hp + H].set((b_ih[0, 0] + b_hh[0, 0]).astype(f32))
    bx = bx.at[0, 1 * Hp:1 * Hp + H].set((b_ih[1, 0] + b_hh[1, 0]).astype(f32))
    bx = bx.at[0, 2 * Hp:2 * Hp + H].set(b_ih[2, 0].astype(f32))
    bhn = jnp.zeros((1, Hp), f32).at[0, :H].set(b_hh[2, 0].astype(f32))
    return wih_all, whh_all, bx, bhn


def question_module_forward(questions, emb_table, w_ih, w_hh, b_ih, b_hh,
                            *, time_chunk=8, max_batch_block=256):
    """Mirror of QuestionModule.forward(questions, embedding)."""
    B, S = questions.shape
    VOCAB, H = emb_table.shape
    Hp = _round_up(H, 128)    # lane-dense hidden / gate width

    # Batch blocking: sublane-dense, and large batches split into MXU-friendly
    # blocks sharded "parallel" across TensorCores.
    Bp = _round_up(B, 8)
    bb = min(max_batch_block, Bp)
    Bp = _round_up(Bp, bb)

    # Time chunking (streamed over the grid).  Any leading padding steps are
    # exact identity steps: z-gate pre-activation forced large -> z == 1.0 in
    # f32 -> h stays exactly 0 through them.
    ts = min(time_chunk, S)
    Sp = _round_up(S, ts)
    pad_t = Sp - S

    wih_all, whh_all, bx, bhn = _prepare_gru_params(w_ih, w_hh, b_ih, b_hh, Hp)

    f32 = jnp.float32
    tokens_t = questions.T                                       # (S, B)
    if S * B >= VOCAB:
        # Project the embedding table once, then gather per token.
        emb_pad = jnp.zeros((VOCAB, Hp), f32).at[:, :H].set(emb_table.astype(f32))
        proj_table = emb_pad @ wih_all + bx                      # (VOCAB, 3Hp)
        xg_real = jnp.take(proj_table, tokens_t, axis=0)         # (S, B, 3Hp)
    else:
        embedded = jnp.take(emb_table.astype(f32), tokens_t, axis=0)   # (S,B,H)
        emb_p = jnp.zeros((S, B, Hp), f32).at[:, :, :H].set(embedded)
        xg_real = (emb_p.reshape(S * B, Hp) @ wih_all + bx).reshape(S, B, 3 * Hp)

    xg = jnp.zeros((Sp, Bp, 3 * Hp), f32)
    xg = xg.at[pad_t:, :B, :].set(xg_real)
    if pad_t:
        xg = xg.at[:pad_t, :, Hp:2 * Hp].set(30.0)   # identity steps (z == 1)

    # bf16 MXU operands; halves VMEM/DMA for the streamed slab.  Gate math and
    # the carried hidden state stay f32 inside the kernel.
    xg = xg.astype(jnp.bfloat16)
    whh_bf16 = whh_all.astype(jnp.bfloat16)

    h_final_p = gru_final_hidden(xg, whh_bf16, bhn, bb=bb, ts=ts)   # (Bp, Hp)
    return h_final_p[:B, :H][None]                                  # (1, B, H)


def gru_reference(embedded, w_ih, w_hh, b_ih, b_hh):
    """Pure-JAX f32 reference (lax.scan) for correctness checking."""
    S, B, H = embedded.shape
    h0 = jnp.zeros((B, H), jnp.float32)

    def step(h, x):
        i_r = x @ w_ih[0] + b_ih[0]
        i_z = x @ w_ih[1] + b_ih[1]
        i_n = x @ w_ih[2] + b_ih[2]
        h_r = h @ w_hh[0] + b_hh[0]
        h_z = h @ w_hh[1] + b_hh[1]
        h_n = h @ w_hh[2] + b_hh[2]
        r = jax.nn.sigmoid(i_r + h_r)
        z = jax.nn.sigmoid(i_z + h_z)
        n = jnp.tanh(i_n + r * h_n)
        return (1.0 - z) * n + z * h, None

    h_final, _ = jax.lax.scan(step, h0, embedded)
    return h_final[None]


if __name__ == "__main__":
    B, S, H, VOCAB = 2, 8, 32, 16

    key = jax.random.PRNGKey(0)
    k_emb, k_wih, k_whh, k_bih, k_bhh, k_q = jax.random.split(key, 6)

    # Embedding table (stand-in for the external `embedding` module).
    emb_table = jax.random.normal(k_emb, (VOCAB, H), jnp.float32)

    # GRU params, gate-stacked and pre-transposed as (3, H, H), gate order
    # (r, z, n), xavier_normal-scaled weights like the PyTorch init.
    xavier_std = float(np.sqrt(2.0 / (H + H)))
    w_ih = jax.random.normal(k_wih, (3, H, H), jnp.float32) * xavier_std
    w_hh = jax.random.normal(k_whh, (3, H, H), jnp.float32) * xavier_std
    b_scale = 1.0 / float(np.sqrt(H))
    b_ih = jax.random.uniform(k_bih, (3, 1, H), jnp.float32, -b_scale, b_scale)
    b_hh = jax.random.uniform(k_bhh, (3, 1, H), jnp.float32, -b_scale, b_scale)

    # Token ids.
    questions = jax.random.randint(k_q, (B, S), 0, VOCAB, jnp.int32)

    h_final = question_module_forward(questions, emb_table, w_ih, w_hh, b_ih, b_hh)
    h_final = jax.block_until_ready(h_final)
    assert h_final.shape == (1, B, H)

    # Cross-check against the pure-f32 reference (bf16 MXU operands in the
    # kernel -> loosened tolerance).
    embedded = jnp.take(emb_table, questions.T, axis=0).astype(jnp.float32)
    ref = jax.block_until_ready(gru_reference(embedded, w_ih, w_hh, b_ih, b_hh))
    np.testing.assert_allclose(np.asarray(h_final), np.asarray(ref),
                               rtol=3e-2, atol=3e-2)

    print("KERNEL_OK")
</pallas_src>

<mosaic_0001>
module attributes {stable_mosaic.version = 11 : i64} {
  func.func @gru_chunk_kernel(%arg0: i32, %arg1: i32, %arg2: memref<8x8x384xbf16, #tpu.memory_space<vmem>>, %arg3: memref<128x384xbf16, #tpu.memory_space<vmem>>, %arg4: memref<1x128xf32, #tpu.memory_space<vmem>>, %arg5: memref<8x128xf32, #tpu.memory_space<vmem>>, %arg6: memref<8x128xf32, #tpu.memory_space<vmem>>) attributes {dimension_semantics = [#tpu.dimension_semantics<parallel>, #tpu.dimension_semantics<arbitrary>], iteration_bounds = array<i64: 1, 1>, scalar_prefetch = 0 : i64, scratch_operands = 1 : i64, tpu.core_type = #tpu.core_type<tc>, window_params = [{transform_indices = @transform_0, window_bounds = array<i64: 8, 8, 384>}, {pipeline_mode = #tpu.pipeline_mode<synchronous>, transform_indices = @transform_1, window_bounds = array<i64: 128, 384>}, {pipeline_mode = #tpu.pipeline_mode<synchronous>, transform_indices = @transform_2, window_bounds = array<i64: 1, 128>}, {transform_indices = @transform_3, window_bounds = array<i64: 8, 128>}]} {
    %c0_i32 = arith.constant 0 : i32
    %0 = arith.cmpi eq, %arg1, %c0_i32 : i32
    %1 = arith.extui %0 : i1 to i32
    %c0_i32_0 = arith.constant 0 : i32
    %2 = arith.cmpi ne, %1, %c0_i32_0 : i32
    scf.if %2 {
      %cst_50 = arith.constant 0.000000e+00 : f32
      %260 = vector.broadcast %cst_50 : f32 to vector<8x128xf32>
      %c0_51 = arith.constant 0 : index
      %c0_52 = arith.constant 0 : index
      %261 = vector.load %arg6[%c0_51, %c0_52] : memref<8x128xf32, #tpu.memory_space<vmem>>, vector<8x128xf32>
      tpu.vector_store %arg6[%c0_51, %c0_52], %260 {strides = array<i32>} : memref<8x128xf32, #tpu.memory_space<vmem>>, vector<8x128xf32>,
    } else {
    }
    %c0 = arith.constant 0 : index
    %c0_1 = arith.constant 0 : index
    %3 = vector.load %arg4[%c0, %c0_1] : memref<1x128xf32, #tpu.memory_space<vmem>>, vector<1x128xf32>
    %4 = vector.shape_cast %3 : vector<1x128xf32> to vector<1x128xf32>
    %5 = vector.broadcast %4 : vector<1x128xf32> to vector<8x128xf32>
    %c0_2 = arith.constant 0 : index
    %c0_3 = arith.constant 0 : index
    %6 = vector.load %arg3[%c0_2, %c0_3] : memref<128x384xbf16, #tpu.memory_space<vmem>>, vector<128x384xbf16>
    %c0_4 = arith.constant 0 : index
    %c0_5 = arith.constant 0 : index
    %7 = vector.load %arg6[%c0_4, %c0_5] : memref<8x128xf32, #tpu.memory_space<vmem>>, vector<8x128xf32>
    %c0_i32_6 = arith.constant 0 : i32
    %8 = arith.index_cast %c0_i32_6 : i32 to index
    %c0_7 = arith.constant 0 : index
    %c0_8 = arith.constant 0 : index
    %9 = vector.load %arg2[%8, %c0_7, %c0_8] : memref<8x8x384xbf16, #tpu.memory_space<vmem>>, vector<1x8x384xbf16>
    %10 = vector.shape_cast %9 : vector<1x8x384xbf16> to vector<8x384xbf16>
    %11 = arith.extf %10 : vector<8x384xbf16> to vector<8x384xf32>
    %12 = arith.truncf %7 : vector<8x128xf32> to vector<8x128xbf16>
    %cst = arith.constant dense<0.000000e+00> : vector<8x384xf32>
    %13 = tpu.matmul %12, %6, %cst {dimension_numbers = #tpu.dot_dimension_numbers<[1], [0], [0], [1], [0, 0, 1, 1], [], []>} : vector<8x128xbf16>, vector<128x384xbf16>, vector<8x384xf32> -> vector<8x384xf32>
    %14 = vector.extract_strided_slice %11 {offsets = [0, 0], sizes = [8, 128], strides = [1, 1]} : vector<8x384xf32> to vector<8x128xf32>
    %15 = vector.extract_strided_slice %13 {offsets = [0, 0], sizes = [8, 128], strides = [1, 1]} : vector<8x384xf32> to vector<8x128xf32>
    %16 = arith.addf %14, %15 : vector<8x128xf32>
    %17 = arith.negf %16 : vector<8x128xf32>
    %18 = math.exp %17 : vector<8x128xf32>
    %cst_9 = arith.constant 1.000000e+00 : f32
    %19 = vector.broadcast %cst_9 : f32 to vector<8x128xf32>
    %20 = arith.addf %19, %18 : vector<8x128xf32>
    %21 = arith.divf %19, %20 : vector<8x128xf32>
    %22 = vector.extract_strided_slice %11 {offsets = [0, 128], sizes = [8, 128], strides = [1, 1]} : vector<8x384xf32> to vector<8x128xf32>
    %23 = vector.extract_strided_slice %13 {offsets = [0, 128], sizes = [8, 128], strides = [1, 1]} : vector<8x384xf32> to vector<8x128xf32>
    %24 = arith.addf %22, %23 : vector<8x128xf32>
    %25 = arith.negf %24 : vector<8x128xf32>
    %26 = math.exp %25 : vector<8x128xf32>
    %cst_10 = arith.constant 1.000000e+00 : f32
    %27 = vector.broadcast %cst_10 : f32 to vector<8x128xf32>
    %28 = arith.addf %27, %26 : vector<8x128xf32>
    %29 = arith.divf %27, %28 : vector<8x128xf32>
    %30 = vector.extract_strided_slice %11 {offsets = [0, 256], sizes = [8, 128], strides = [1, 1]} : vector<8x384xf32> to vector<8x128xf32>
    %31 = vector.extract_strided_slice %13 {offsets = [0, 256], sizes = [8, 128], strides = [1, 1]} : vector<8x384xf32> to vector<8x128xf32>
    %32 = arith.addf %31, %5 : vector<8x128xf32>
    %33 = arith.mulf %21, %32 : vector<8x128xf32>
    %34 = arith.addf %30, %33 : vector<8x128xf32>
    %35 = math.tanh %34 : vector<8x128xf32>
    %36 = arith.subf %7, %35 : vector<8x128xf32>
    %37 = arith.mulf %29, %36 : vector<8x128xf32>
    %38 = arith.addf %35, %37 : vector<8x128xf32>
    %c1_i32 = arith.constant 1 : i32
    %39 = arith.index_cast %c1_i32 : i32 to index
    %c0_11 = arith.constant 0 : index
    %c0_12 = arith.constant 0 : index
    %40 = vector.load %arg2[%39, %c0_11, %c0_12] : memref<8x8x384xbf16, #tpu.memory_space<vmem>>, vector<1x8x384xbf16>
    %41 = vector.shape_cast %40 : vector<1x8x384xbf16> to vector<8x384xbf16>
    %42 = arith.extf %41 : vector<8x384xbf16> to vector<8x384xf32>
    %43 = arith.truncf %38 : vector<8x128xf32> to vector<8x128xbf16>
    %cst_13 = arith.constant dense<0.000000e+00> : vector<8x384xf32>
    %44 = tpu.matmul %43, %6, %cst_13 {dimension_numbers = #tpu.dot_dimension_numbers<[1], [0], [0], [1], [0, 0, 1, 1], [], []>} : vector<8x128xbf16>, vector<128x384xbf16>, vector<8x384xf32> -> vector<8x384xf32>
    %45 = vector.extract_strided_slice %42 {offsets = [0, 0], sizes = [8, 128], strides = [1, 1]} : vector<8x384xf32> to vector<8x128xf32>
    %46 = vector.extract_strided_slice %44 {offsets = [0, 0], sizes = [8, 128], strides = [1, 1]} : vector<8x384xf32> to vector<8x128xf32>
    %47 = arith.addf %45, %46 : vector<8x128xf32>
    %48 = arith.negf %47 : vector<8x128xf32>
    %49 = math.exp %48 : vector<8x128xf32>
    %cst_14 = arith.constant 1.000000e+00 : f32
    %50 = vector.broadcast %cst_14 : f32 to vector<8x128xf32>
    %51 = arith.addf %50, %49 : vector<8x128xf32>
    %52 = arith.divf %50, %51 : vector<8x128xf32>
    %53 = vector.extract_strided_slice %42 {offsets = [0, 128], sizes = [8, 128], strides = [1, 1]} : vector<8x384xf32> to vector<8x128xf32>
    %54 = vector.extract_strided_slice %44 {offsets = [0, 128], sizes = [8, 128], strides = [1, 1]} : vector<8x384xf32> to vector<8x128xf32>
    %55 = arith.addf %53, %54 : vector<8x128xf32>
    %56 = arith.negf %55 : vector<8x128xf32>
    %57 = math.exp %56 : vector<8x128xf32>
    %cst_15 = arith.constant 1.000000e+00 : f32
    %58 = vector.broadcast %cst_15 : f32 to vector<8x128xf32>
    %59 = arith.addf %58, %57 : vector<8x128xf32>
    %60 = arith.divf %58, %59 : vector<8x128xf32>
    %61 = vector.extract_strided_slice %42 {offsets = [0, 256], sizes = [8, 128], strides = [1, 1]} : vector<8x384xf32> to vector<8x128xf32>
    %62 = vector.extract_strided_slice %44 {offsets = [0, 256], sizes = [8, 128], strides = [1, 1]} : vector<8x384xf32> to vector<8x128xf32>
    %63 = arith.addf %62, %5 : vector<8x128xf32>
    %64 = arith.mulf %52, %63 : vector<8x128xf32>
    %65 = arith.addf %61, %64 : vector<8x128xf32>
    %66 = math.tanh %65 : vector<8x128xf32>
    %67 = arith.subf %38, %66 : vector<8x128xf32>
    %68 = arith.mulf %60, %67 : vector<8x128xf32>
    %69 = arith.addf %66, %68 : vector<8x128xf32>
    %c2_i32 = arith.constant 2 : i32
    %70 = arith.index_cast %c2_i32 : i32 to index
    %c0_16 = arith.constant 0 : index
    %c0_17 = arith.constant 0 : index
    %71 = vector.load %arg2[%70, %c0_16, %c0_17] : memref<8x8x384xbf16, #tpu.memory_space<vmem>>, vector<1x8x384xbf16>
    %72 = vector.shape_cast %71 : vector<1x8x384xbf16> to vector<8x384xbf16>
    %73 = arith.extf %72 : vector<8x384xbf16> to vector<8x384xf32>
    %74 = arith.truncf %69 : vector<8x128xf32> to vector<8x128xbf16>
    %cst_18 = arith.constant dense<0.000000e+00> : vector<8x384xf32>
    %75 = tpu.matmul %74, %6, %cst_18 {dimension_numbers = #tpu.dot_dimension_numbers<[1], [0], [0], [1], [0, 0, 1, 1], [], []>} : vector<8x128xbf16>, vector<128x384xbf16>, vector<8x384xf32> -> vector<8x384xf32>
    %76 = vector.extract_strided_slice %73 {offsets = [0, 0], sizes = [8, 128], strides = [1, 1]} : vector<8x384xf32> to vector<8x128xf32>
    %77 = vector.extract_strided_slice %75 {offsets = [0, 0], sizes = [8, 128], strides = [1, 1]} : vector<8x384xf32> to vector<8x128xf32>
    %78 = arith.addf %76, %77 : vector<8x128xf32>
    %79 = arith.negf %78 : vector<8x128xf32>
    %80 = math.exp %79 : vector<8x128xf32>
    %cst_19 = arith.constant 1.000000e+00 : f32
    %81 = vector.broadcast %cst_19 : f32 to vector<8x128xf32>
    %82 = arith.addf %81, %80 : vector<8x128xf32>
    %83 = arith.divf %81, %82 : vector<8x128xf32>
    %84 = vector.extract_strided_slice %73 {offsets = [0, 128], sizes = [8, 128], strides = [1, 1]} : vector<8x384xf32> to vector<8x128xf32>
    %85 = vector.extract_strided_slice %75 {offsets = [0, 128], sizes = [8, 128], strides = [1, 1]} : vector<8x384xf32> to vector<8x128xf32>
    %86 = arith.addf %84, %85 : vector<8x128xf32>
    %87 = arith.negf %86 : vector<8x128xf32>
    %88 = math.exp %87 : vector<8x128xf32>
    %cst_20 = arith.constant 1.000000e+00 : f32
    %89 = vector.broadcast %cst_20 : f32 to vector<8x128xf32>
    %90 = arith.addf %89, %88 : vector<8x128xf32>
    %91 = arith.divf %89, %90 : vector<8x128xf32>
    %92 = vector.extract_strided_slice %73 {offsets = [0, 256], sizes = [8, 128], strides = [1, 1]} : vector<8x384xf32> to vector<8x128xf32>
    %93 = vector.extract_strided_slice %75 {offsets = [0, 256], sizes = [8, 128], strides = [1, 1]} : vector<8x384xf32> to vector<8x128xf32>
    %94 = arith.addf %93, %5 : vector<8x128xf32>
    %95 = arith.mulf %83, %94 : vector<8x128xf32>
    %96 = arith.addf %92, %95 : vector<8x128xf32>
    %97 = math.tanh %96 : vector<8x128xf32>
    %98 = arith.subf %69, %97 : vector<8x128xf32>
    %99 = arith.mulf %91, %98 : vector<8x128xf32>
    %100 = arith.addf %97, %99 : vector<8x128xf32>
    %c3_i32 = arith.constant 3 : i32
    %101 = arith.index_cast %c3_i32 : i32 to index
    %c0_21 = arith.constant 0 : index
    %c0_22 = arith.constant 0 : index
    %102 = vector.load %arg2[%101, %c0_21, %c0_22] : memref<8x8x384xbf16, #tpu.memory_space<vmem>>, vector<1x8x384xbf16>
    %103 = vector.shape_cast %102 : vector<1x8x384xbf16> to vector<8x384xbf16>
    %104 = arith.extf %103 : vector<8x384xbf16> to vector<8x384xf32>
    %105 = arith.truncf %100 : vector<8x128xf32> to vector<8x128xbf16>
    %cst_23 = arith.constant dense<0.000000e+00> : vector<8x384xf32>
    %106 = tpu.matmul %105, %6, %cst_23 {dimension_numbers = #tpu.dot_dimension_numbers<[1], [0], [0], [1], [0, 0, 1, 1], [], []>} : vector<8x128xbf16>, vector<128x384xbf16>, vector<8x384xf32> -> vector<8x384xf32>
    %107 = vector.extract_strided_slice %104 {offsets = [0, 0], sizes = [8, 128], strides = [1, 1]} : vector<8x384xf32> to vector<8x128xf32>
    %108 = vector.extract_strided_slice %106 {offsets = [0, 0], sizes = [8, 128], strides = [1, 1]} : vector<8x384xf32> to vector<8x128xf32>
    %109 = arith.addf %107, %108 : vector<8x128xf32>
    %110 = arith.negf %109 : vector<8x128xf32>
    %111 = math.exp %110 : vector<8x128xf32>
    %cst_24 = arith.constant 1.000000e+00 : f32
    %112 = vector.broadcast %cst_24 : f32 to vector<8x128xf32>
    %113 = arith.addf %112, %111 : vector<8x128xf32>
    %114 = arith.divf %112, %113 : vector<8x128xf32>
    %115 = vector.extract_strided_slice %104 {offsets = [0, 128], sizes = [8, 128], strides = [1, 1]} : vector<8x384xf32> to vector<8x128xf32>
    %116 = vector.extract_strided_slice %106 {offsets = [0, 128], sizes = [8, 128], strides = [1, 1]} : vector<8x384xf32> to vector<8x128xf32>
    %117 = arith.addf %115, %116 : vector<8x128xf32>
    %118 = arith.negf %117 : vector<8x128xf32>
    %119 = math.exp %118 : vector<8x128xf32>
    %cst_25 = arith.constant 1.000000e+00 : f32
    %120 = vector.broadcast %cst_25 : f32 to vector<8x128xf32>
    %121 = arith.addf %120, %119 : vector<8x128xf32>
    %122 = arith.divf %120, %121 : vector<8x128xf32>
    %123 = vector.extract_strided_slice %104 {offsets = [0, 256], sizes = [8, 128], strides = [1, 1]} : vector<8x384xf32> to vector<8x128xf32>
    %124 = vector.extract_strided_slice %106 {offsets = [0, 256], sizes = [8, 128], strides = [1, 1]} : vector<8x384xf32> to vector<8x128xf32>
    %125 = arith.addf %124, %5 : vector<8x128xf32>
    %126 = arith.mulf %114, %125 : vector<8x128xf32>
    %127 = arith.addf %123, %126 : vector<8x128xf32>
    %128 = math.tanh %127 : vector<8x128xf32>
    %129 = arith.subf %100, %128 : vector<8x128xf32>
    %130 = arith.mulf %122, %129 : vector<8x128xf32>
    %131 = arith.addf %128, %130 : vector<8x128xf32>
    %c4_i32 = arith.constant 4 : i32
    %132 = arith.index_cast %c4_i32 : i32 to index
    %c0_26 = arith.constant 0 : index
    %c0_27 = arith.constant 0 : index
    %133 = vector.load %arg2[%132, %c0_26, %c0_27] : memref<8x8x384xbf16, #tpu.memory_space<vmem>>, vector<1x8x384xbf16>
    %134 = vector.shape_cast %133 : vector<1x8x384xbf16> to vector<8x384xbf16>
    %135 = arith.extf %134 : vector<8x384xbf16> to vector<8x384xf32>
    %136 = arith.truncf %131 : vector<8x128xf32> to vector<8x128xbf16>
    %cst_28 = arith.constant dense<0.000000e+00> : vector<8x384xf32>
    %137 = tpu.matmul %136, %6, %cst_28 {dimension_numbers = #tpu.dot_dimension_numbers<[1], [0], [0], [1], [0, 0, 1, 1], [], []>} : vector<8x128xbf16>, vector<128x384xbf16>, vector<8x384xf32> -> vector<8x384xf32>
    %138 = vector.extract_strided_slice %135 {offsets = [0, 0], sizes = [8, 128], strides = [1, 1]} : vector<8x384xf32> to vector<8x128xf32>
    %139 = vector.extract_strided_slice %137 {offsets = [0, 0], sizes = [8, 128], strides = [1, 1]} : vector<8x384xf32> to vector<8x128xf32>
    %140 = arith.addf %138, %139 : vector<8x128xf32>
    %141 = arith.negf %140 : vector<8x128xf32>
    %142 = math.exp %141 : vector<8x128xf32>
    %cst_29 = arith.constant 1.000000e+00 : f32
    %143 = vector.broadcast %cst_29 : f32 to vector<8x128xf32>
    %144 = arith.addf %143, %142 : vector<8x128xf32>
    %145 = arith.divf %143, %144 : vector<8x128xf32>
    %146 = vector.extract_strided_slice %135 {offsets = [0, 128], sizes = [8, 128], strides = [1, 1]} : vector<8x384xf32> to vector<8x128xf32>
    %147 = vector.extract_strided_slice %137 {offsets = [0, 128], sizes = [8, 128], strides = [1, 1]} : vector<8x384xf32> to vector<8x128xf32>
    %148 = arith.addf %146, %147 : vector<8x128xf32>
    %149 = arith.negf %148 : vector<8x128xf32>
    %150 = math.exp %149 : vector<8x128xf32>
    %cst_30 = arith.constant 1.000000e+00 : f32
    %151 = vector.broadcast %cst_30 : f32 to vector<8x128xf32>
    %152 = arith.addf %151, %150 : vector<8x128xf32>
    %153 = arith.divf %151, %152 : vector<8x128xf32>
    %154 = vector.extract_strided_slice %135 {offsets = [0, 256], sizes = [8, 128], strides = [1, 1]} : vector<8x384xf32> to vector<8x128xf32>
    %155 = vector.extract_strided_slice %137 {offsets = [0, 256], sizes = [8, 128], strides = [1, 1]} : vector<8x384xf32> to vector<8x128xf32>
    %156 = arith.addf %155, %5 : vector<8x128xf32>
    %157 = arith.mulf %145, %156 : vector<8x128xf32>
    %158 = arith.addf %154, %157 : vector<8x128xf32>
    %159 = math.tanh %158 : vector<8x128xf32>
    %160 = arith.subf %131, %159 : vector<8x128xf32>
    %161 = arith.mulf %153, %160 : vector<8x128xf32>
    %162 = arith.addf %159, %161 : vector<8x128xf32>
    %c5_i32 = arith.constant 5 : i32
    %163 = arith.index_cast %c5_i32 : i32 to index
    %c0_31 = arith.constant 0 : index
    %c0_32 = arith.constant 0 : index
    %164 = vector.load %arg2[%163, %c0_31, %c0_32] : memref<8x8x384xbf16, #tpu.memory_space<vmem>>, vector<1x8x384xbf16>
    %165 = vector.shape_cast %164 : vector<1x8x384xbf16> to vector<8x384xbf16>
    %166 = arith.extf %165 : vector<8x384xbf16> to vector<8x384xf32>
    %167 = arith.truncf %162 : vector<8x128xf32> to vector<8x128xbf16>
    %cst_33 = arith.constant dense<0.000000e+00> : vector<8x384xf32>
    %168 = tpu.matmul %167, %6, %cst_33 {dimension_numbers = #tpu.dot_dimension_numbers<[1], [0], [0], [1], [0, 0, 1, 1], [], []>} : vector<8x128xbf16>, vector<128x384xbf16>, vector<8x384xf32> -> vector<8x384xf32>
    %169 = vector.extract_strided_slice %166 {offsets = [0, 0], sizes = [8, 128], strides = [1, 1]} : vector<8x384xf32> to vector<8x128xf32>
    %170 = vector.extract_strided_slice %168 {offsets = [0, 0], sizes = [8, 128], strides = [1, 1]} : vector<8x384xf32> to vector<8x128xf32>
    %171 = arith.addf %169, %170 : vector<8x128xf32>
    %172 = arith.negf %171 : vector<8x128xf32>
    %173 = math.exp %172 : vector<8x128xf32>
    %cst_34 = arith.constant 1.000000e+00 : f32
    %174 = vector.broadcast %cst_34 : f32 to vector<8x128xf32>
    %175 = arith.addf %174, %173 : vector<8x128xf32>
    %176 = arith.divf %174, %175 : vector<8x128xf32>
    %177 = vector.extract_strided_slice %166 {offsets = [0, 128], sizes = [8, 128], strides = [1, 1]} : vector<8x384xf32> to vector<8x128xf32>
    %178 = vector.extract_strided_slice %168 {offsets = [0, 128], sizes = [8, 128], strides = [1, 1]} : vector<8x384xf32> to vector<8x128xf32>
    %179 = arith.addf %177, %178 : vector<8x128xf32>
    %180 = arith.negf %179 : vector<8x128xf32>
    %181 = math.exp %180 : vector<8x128xf32>
    %cst_35 = arith.constant 1.000000e+00 : f32
    %182 = vector.broadcast %cst_35 : f32 to vector<8x128xf32>
    %183 = arith.addf %182, %181 : vector<8x128xf32>
    %184 = arith.divf %182, %183 : vector<8x128xf32>
    %185 = vector.extract_strided_slice %166 {offsets = [0, 256], sizes = [8, 128], strides = [1, 1]} : vector<8x384xf32> to vector<8x128xf32>
    %186 = vector.extract_strided_slice %168 {offsets = [0, 256], sizes = [8, 128], strides = [1, 1]} : vector<8x384xf32> to vector<8x128xf32>
    %187 = arith.addf %186, %5 : vector<8x128xf32>
    %188 = arith.mulf %176, %187 : vector<8x128xf32>
    %189 = arith.addf %185, %188 : vector<8x128xf32>
    %190 = math.tanh %189 : vector<8x128xf32>
    %191 = arith.subf %162, %190 : vector<8x128xf32>
    %192 = arith.mulf %184, %191 : vector<8x128xf32>
    %193 = arith.addf %190, %192 : vector<8x128xf32>
    %c6_i32 = arith.constant 6 : i32
    %194 = arith.index_cast %c6_i32 : i32 to index
    %c0_36 = arith.constant 0 : index
    %c0_37 = arith.constant 0 : index
    %195 = vector.load %arg2[%194, %c0_36, %c0_37] : memref<8x8x384xbf16, #tpu.memory_space<vmem>>, vector<1x8x384xbf16>
    %196 = vector.shape_cast %195 : vector<1x8x384xbf16> to vector<8x384xbf16>
    %197 = arith.extf %196 : vector<8x384xbf16> to vector<8x384xf32>
    %198 = arith.truncf %193 : vector<8x128xf32> to vector<8x128xbf16>
    %cst_38 = arith.constant dense<0.000000e+00> : vector<8x384xf32>
    %199 = tpu.matmul %198, %6, %cst_38 {dimension_numbers = #tpu.dot_dimension_numbers<[1], [0], [0], [1], [0, 0, 1, 1], [], []>} : vector<8x128xbf16>, vector<128x384xbf16>, vector<8x384xf32> -> vector<8x384xf32>
    %200 = vector.extract_strided_slice %197 {offsets = [0, 0], sizes = [8, 128], strides = [1, 1]} : vector<8x384xf32> to vector<8x128xf32>
    %201 = vector.extract_strided_slice %199 {offsets = [0, 0], sizes = [8, 128], strides = [1, 1]} : vector<8x384xf32> to vector<8x128xf32>
    %202 = arith.addf %200, %201 : vector<8x128xf32>
    %203 = arith.negf %202 : vector<8x128xf32>
    %204 = math.exp %203 : vector<8x128xf32>
    %cst_39 = arith.constant 1.000000e+00 : f32
    %205 = vector.broadcast %cst_39 : f32 to vector<8x128xf32>
    %206 = arith.addf %205, %204 : vector<8x128xf32>
    %207 = arith.divf %205, %206 : vector<8x128xf32>
    %208 = vector.extract_strided_slice %197 {offsets = [0, 128], sizes = [8, 128], strides = [1, 1]} : vector<8x384xf32> to vector<8x128xf32>
    %209 = vector.extract_strided_slice %199 {offsets = [0, 128], sizes = [8, 128], strides = [1, 1]} : vector<8x384xf32> to vector<8x128xf32>
    %210 = arith.addf %208, %209 : vector<8x128xf32>
    %211 = arith.negf %210 : vector<8x128xf32>
    %212 = math.exp %211 : vector<8x128xf32>
    %cst_40 = arith.constant 1.000000e+00 : f32
    %213 = vector.broadcast %cst_40 : f32 to vector<8x128xf32>
    %214 = arith.addf %213, %212 : vector<8x128xf32>
    %215 = arith.divf %213, %214 : vector<8x128xf32>
    %216 = vector.extract_strided_slice %197 {offsets = [0, 256], sizes = [8, 128], strides = [1, 1]} : vector<8x384xf32> to vector<8x128xf32>
    %217 = vector.extract_strided_slice %199 {offsets = [0, 256], sizes = [8, 128], strides = [1, 1]} : vector<8x384xf32> to vector<8x128xf32>
    %218 = arith.addf %217, %5 : vector<8x128xf32>
    %219 = arith.mulf %207, %218 : vector<8x128xf32>
    %220 = arith.addf %216, %219 : vector<8x128xf32>
    %221 = math.tanh %220 : vector<8x128xf32>
    %222 = arith.subf %193, %221 : vector<8x128xf32>
    %223 = arith.mulf %215, %222 : vector<8x128xf32>
    %224 = arith.addf %221, %223 : vector<8x128xf32>
    %c7_i32 = arith.constant 7 : i32
    %225 = arith.index_cast %c7_i32 : i32 to index
    %c0_41 = arith.constant 0 : index
    %c0_42 = arith.constant 0 : index
    %226 = vector.load %arg2[%225, %c0_41, %c0_42] : memref<8x8x384xbf16, #tpu.memory_space<vmem>>, vector<1x8x384xbf16>
    %227 = vector.shape_cast %226 : vector<1x8x384xbf16> to vector<8x384xbf16>
    %228 = arith.extf %227 : vector<8x384xbf16> to vector<8x384xf32>
    %229 = arith.truncf %224 : vector<8x128xf32> to vector<8x128xbf16>
    %cst_43 = arith.constant dense<0.000000e+00> : vector<8x384xf32>
    %230 = tpu.matmul %229, %6, %cst_43 {dimension_numbers = #tpu.dot_dimension_numbers<[1], [0], [0], [1], [0, 0, 1, 1], [], []>} : vector<8x128xbf16>, vector<128x384xbf16>, vector<8x384xf32> -> vector<8x384xf32>
    %231 = vector.extract_strided_slice %228 {offsets = [0, 0], sizes = [8, 128], strides = [1, 1]} : vector<8x384xf32> to vector<8x128xf32>
    %232 = vector.extract_strided_slice %230 {offsets = [0, 0], sizes = [8, 128], strides = [1, 1]} : vector<8x384xf32> to vector<8x128xf32>
    %233 = arith.addf %231, %232 : vector<8x128xf32>
    %234 = arith.negf %233 : vector<8x128xf32>
    %235 = math.exp %234 : vector<8x128xf32>
    %cst_44 = arith.constant 1.000000e+00 : f32
    %236 = vector.broadcast %cst_44 : f32 to vector<8x128xf32>
    %237 = arith.addf %236, %235 : vector<8x128xf32>
    %238 = arith.divf %236, %237 : vector<8x128xf32>
    %239 = vector.extract_strided_slice %228 {offsets = [0, 128], sizes = [8, 128], strides = [1, 1]} : vector<8x384xf32> to vector<8x128xf32>
    %240 = vector.extract_strided_slice %230 {offsets = [0, 128], sizes = [8, 128], strides = [1, 1]} : vector<8x384xf32> to vector<8x128xf32>
    %241 = arith.addf %239, %240 : vector<8x128xf32>
    %242 = arith.negf %241 : vector<8x128xf32>
    %243 = math.exp %242 : vector<8x128xf32>
    %cst_45 = arith.constant 1.000000e+00 : f32
    %244 = vector.broadcast %cst_45 : f32 to vector<8x128xf32>
    %245 = arith.addf %244, %243 : vector<8x128xf32>
    %246 = arith.divf %244, %245 : vector<8x128xf32>
    %247 = vector.extract_strided_slice %228 {offsets = [0, 256], sizes = [8, 128], strides = [1, 1]} : vector<8x384xf32> to vector<8x128xf32>
    %248 = vector.extract_strided_slice %230 {offsets = [0, 256], sizes = [8, 128], strides = [1, 1]} : vector<8x384xf32> to vector<8x128xf32>
    %249 = arith.addf %248, %5 : vector<8x128xf32>
    %250 = arith.mulf %238, %249 : vector<8x128xf32>
    %251 = arith.addf %247, %250 : vector<8x128xf32>
    %252 = math.tanh %251 : vector<8x128xf32>
    %253 = arith.subf %224, %252 : vector<8x128xf32>
    %254 = arith.mulf %246, %253 : vector<8x128xf32>
    %255 = arith.addf %252, %254 : vector<8x128xf32>
    %c8_i32 = arith.constant 8 : i32
    %c0_46 = arith.constant 0 : index
    %c0_47 = arith.constant 0 : index
    %256 = vector.load %arg6[%c0_46, %c0_47] : memref<8x128xf32, #tpu.memory_space<vmem>>, vector<8x128xf32>
    tpu.vector_store %arg6[%c0_46, %c0_47], %255 {strides = array<i32>} : memref<8x128xf32, #tpu.memory_space<vmem>>, vector<8x128xf32>,
    %c0_i32_48 = arith.constant 0 : i32
    %257 = arith.cmpi eq, %arg1, %c0_i32_48 : i32
    %258 = arith.extui %257 : i1 to i32
    %c0_i32_49 = arith.constant 0 : i32
    %259 = arith.cmpi ne, %258, %c0_i32_49 : i32
    scf.if %259 {
      %c0_50 = arith.constant 0 : index
      %c0_51 = arith.constant 0 : index
      %260 = vector.load %arg6[%c0_50, %c0_51] : memref<8x128xf32, #tpu.memory_space<vmem>>, vector<8x128xf32>
      %c0_52 = arith.constant 0 : index
      %c0_53 = arith.constant 0 : index
      %261 = vector.load %arg5[%c0_52, %c0_53] : memref<8x128xf32, #tpu.memory_space<vmem>>, vector<8x128xf32>
      tpu.vector_store %arg5[%c0_52, %c0_53], %260 {strides = array<i32>} : memref<8x128xf32, #tpu.memory_space<vmem>>, vector<8x128xf32>,
    } else {
    }
    return
  }
  func.func @transform_0(%arg0: i32, %arg1: i32) -> (i32, i32, i32) {
    %c0_i32 = arith.constant 0 : i32
    %c0_i32_0 = arith.constant 0 : i32
    return %arg1, %arg0, %c0_i32 : i32, i32, i32
  }
  func.func @transform_1(%arg0: i32, %arg1: i32) -> (i32, i32) {
    %c0_i32 = arith.constant 0 : i32
    %c0_i32_0 = arith.constant 0 : i32
    %c0_i32_1 = arith.constant 0 : i32
    return %c0_i32, %c0_i32_0 : i32, i32
  }
  func.func @transform_2(%arg0: i32, %arg1: i32) -> (i32, i32) {
    %c0_i32 = arith.constant 0 : i32
    %c0_i32_0 = arith.constant 0 : i32
    %c0_i32_1 = arith.constant 0 : i32
    return %c0_i32, %c0_i32_0 : i32, i32
  }
  func.func @transform_3(%arg0: i32, %arg1: i32) -> (i32, i32) {
    %c0_i32 = arith.constant 0 : i32
    %c0_i32_0 = arith.constant 0 : i32
    return %arg0, %c0_i32 : i32, i32
  }
}

</mosaic_0001>

<llo_original>
// kernel: tpu_custom_call.1
$region0: #{tpu_custom_call.1}
  #allocation0 [shape = 'u32[]', space=smem, size = 0x4, offset = 0x4, fixed_abs, tag = 'smem constant byte address 0x4 - core index']
  #allocation1 [shape = 'u32[72,128]{1,0:T(1,128)}', space=vmem, size = 0x9000, scoped, tag = 'internal scratch']
  #allocation2 [shape = 'f32[8,128]{1,0:T(8,128)}', space=vmem, size = 0x1000, scoped, tag = 'scratch operand']
  %s0 = inlined_call_operand.hbm [shape: bf16[8,8,384], index: 0, kind: input, shape index: {}]
  %s1 = inlined_call_operand.hbm [shape: bf16[128,384], index: 1, kind: input, shape index: {}]
  %s2 = inlined_call_operand.vmem [shape: f32[1,128], index: 2, kind: input, shape index: {}]
  %s3 = inlined_call_operand.hbm [shape: f32[8,128], index: 3, kind: output, shape index: {}]
  %s4 = sld [smem:[#allocation0]]
  $region38: #{tpu_custom_call.1} parent=0
    _
  %s6 = ssub.s32 1, %s4
  %s7 = scalar_select 0, %s6, %s4
  $region1: #{tpu_custom_call.1} parent=0
    #allocation3 [shape = 'u8[49152]{0}', space=vmem, size = 0xc000, scoped, tag = 'input window, operand 0, single buffered']
    #allocation4 [shape = 's32[1]{0}', space=sflag, size = 0x4, scoped, tag = 'scoped memory for tpu_custom_call.1']
    #allocation5 [shape = 's32[1]{0}', space=sflag, size = 0x4, scoped, tag = 'scoped memory for tpu_custom_call.1']
    #allocation6 [shape = 'u8[98304]{0}', space=vmem, size = 0x18000, scoped, tag = 'input window, operand 1, single buffered']
    #allocation7 [shape = 's32[1]{0}', space=sflag, size = 0x4, scoped, tag = 'scoped memory for tpu_custom_call.1']
    #allocation8 [shape = 'u8[4096]{0}', space=vmem, size = 0x1000, scoped, tag = 'output window, operand 0, single buffered']
    %8 = vsyncpa [#allocation4], 0
    %9 = vsyncpa [#allocation7], 0
    %10 = vsyncpa [#allocation5], 0
    // Predicated region
    $region2: #{tpu_custom_call.1} parent=1 // pred_check
      _
    $region3: #{tpu_custom_call.1} parent=1 // pred_check_branch
      %12 = sbr.rel (0) target = $region5
    $region4: #{tpu_custom_call.1} parent=1 // pred_region
      %14 = vsyncadd [#allocation4], 0
      %s15 = sshll.u32 %s0, 4
      %s16 = int_to_ptr.hbm [resolvable:$true] %s15
      %s17 = sshll.u32 [#allocation3], 4
      %s18 = int_to_ptr.vmem [resolvable:$true] %s17
      %23 = dma.hbm_to_vmem [thread:$0]  %s16, 1536, %s18, [#allocation4], 192, 192, 12
    $region5: #{tpu_custom_call.1} parent=1 // pred_fallthru
      _
    // Predicated region
    $region6: #{tpu_custom_call.1} parent=1 // pred_check
      _
    $region7: #{tpu_custom_call.1} parent=1 // pred_check_branch
      %25 = sbr.rel (0) target = $region9
    $region8: #{tpu_custom_call.1} parent=1 // pred_region
      %27 = vsyncadd [#allocation7], 0
      %s28 = sshll.u32 %s1, 4
      %s29 = int_to_ptr.hbm [resolvable:$true] %s28
      %s30 = sshll.u32 [#allocation6], 4
      %s31 = int_to_ptr.vmem [resolvable:$true] %s30
      %36 = dma.hbm_to_vmem [thread:$0]  %s29, 3072, %s31, [#allocation7], 192, 192, 12
    $region9: #{tpu_custom_call.1} parent=1 // pred_fallthru
      _
    // Predicated region
    $region10: #{tpu_custom_call.1} parent=1 // pred_check
      _
    $region11: #{tpu_custom_call.1} parent=1 // pred_check_branch
      %38 = sbr.rel (0) target = $region13
    $region12: #{tpu_custom_call.1} parent=1 // pred_region
      _
    $region13: #{tpu_custom_call.1} parent=1 // pred_fallthru
      _
    // Predicated region
    $region14: #{tpu_custom_call.1} parent=1 // pred_check
      _
    $region15: #{tpu_custom_call.1} parent=1 // pred_check_branch
      %40 = sbr.rel (0) target = $region17
    $region16: #{tpu_custom_call.1} parent=1 // pred_region
      %42 = dma.done [#allocation4], 1536
    $region17: #{tpu_custom_call.1} parent=1 // pred_fallthru
      _
    // Predicated region
    $region18: #{tpu_custom_call.1} parent=1 // pred_check
      _
    $region19: #{tpu_custom_call.1} parent=1 // pred_check_branch
      %44 = sbr.rel (0) target = $region21
    $region20: #{tpu_custom_call.1} parent=1 // pred_region
      %46 = dma.done [#allocation7], 3072
    $region21: #{tpu_custom_call.1} parent=1 // pred_fallthru
      _
    %p47 = scmp.eq.s32.totalorder 0, 0
    // Predicated region
    $region22: #{tpu_custom_call.1} parent=1 // pred_check
      %p48 = pneg %p47
    $region23: #{tpu_custom_call.1} parent=1 // pred_check_branch
      %50 = sbr.rel (%p48) target = $region25
    $region24: #{tpu_custom_call.1} parent=1 // pred_region
      %51 = vst [vmem:[#allocation2] sm:$0xff] 0.0
    $region25: #{tpu_custom_call.1} parent=1 // pred_fallthru
      _
    %v52 = vld [vmem:[%s2] sm:$0x1]
    %v54 = vperm.slane %v52, 0
    %v56 = vld [vmem:[#allocation6] sm:$0xff]
    %v57 = vld [vmem:[#allocation6 + $0x8] sm:$0xf]
    %v58 = vld [vmem:[#allocation6 + $0xc] sm:$0xff]
    %v59 = vld [vmem:[#allocation6 + $0x14] sm:$0xf]
    %v60 = vld [vmem:[#allocation6 + $0x18] sm:$0xff]
    %v61 = vld [vmem:[#allocation6 + $0x20] sm:$0xf]
    %v62 = vld [vmem:[#allocation6 + $0x24] sm:$0xff]
    %v63 = vld [vmem:[#allocation6 + $0x2c] sm:$0xf]
    %v64 = vld [vmem:[#allocation6 + $0x30] sm:$0xff]
    %v65 = vld [vmem:[#allocation6 + $0x38] sm:$0xf]
    %v66 = vld [vmem:[#allocation6 + $0x3c] sm:$0xff]
    %v67 = vld [vmem:[#allocation6 + $0x44] sm:$0xf]
    %v68 = vld [vmem:[#allocation6 + $0x48] sm:$0xff]
    %v69 = vld [vmem:[#allocation6 + $0x50] sm:$0xf]
    %v70 = vld [vmem:[#allocation6 + $0x54] sm:$0xff]
    %v71 = vld [vmem:[#allocation6 + $0x5c] sm:$0xf]
    %v72 = vld [vmem:[#allocation6 + $0x60] sm:$0xff]
    %v73 = vld [vmem:[#allocation6 + $0x68] sm:$0xf]
    %v74 = vld [vmem:[#allocation6 + $0x6c] sm:$0xff]
    %v75 = vld [vmem:[#allocation6 + $0x74] sm:$0xf]
    %v76 = vld [vmem:[#allocation6 + $0x78] sm:$0xff]
    %v77 = vld [vmem:[#allocation6 + $0x80] sm:$0xf]
    %v78 = vld [vmem:[#allocation6 + $0x84] sm:$0xff]
    %v79 = vld [vmem:[#allocation6 + $0x8c] sm:$0xf]
    %v80 = vld [vmem:[#allocation6 + $0x90] sm:$0xff]
    %v81 = vld [vmem:[#allocation6 + $0x98] sm:$0xf]
    %v82 = vld [vmem:[#allocation6 + $0x9c] sm:$0xff]
    %v83 = vld [vmem:[#allocation6 + $0xa4] sm:$0xf]
    %v84 = vld [vmem:[#allocation6 + $0xa8] sm:$0xff]
    %v85 = vld [vmem:[#allocation6 + $0xb0] sm:$0xf]
    %v86 = vld [vmem:[#allocation6 + $0xb4] sm:$0xff]
    %v87 = vld [vmem:[#allocation6 + $0xbc] sm:$0xf]
    %v88 = vld [vmem:[#allocation2] sm:$0xff]
    %v89 = vld [vmem:[#allocation3] sm:$0xff]
    %v90 = vld [vmem:[#allocation3 + $0x8] sm:$0xf]
    %v91 = vunpack.c.l.bf16 %v89
    %v92 = vunpack.c.h.bf16 %v89
    %v93 = vunpack.c.l.bf16 %v90
    %v94 = vpack.c.bf16 %v88, %v88
    %v127 = vunpack.c.l.b16 %v56
    %v128 = vunpack.c.h.b16 %v56
    %v129 = vunpack.c.l.b16 %v57
    %v130 = vunpack.c.l.b16 %v58
    %v131 = vunpack.c.h.b16 %v58
    %v132 = vunpack.c.l.b16 %v59
    %v133 = vunpack.c.l.b16 %v60
    %v134 = vunpack.c.h.b16 %v60
    %v135 = vunpack.c.l.b16 %v61
    %v136 = vunpack.c.l.b16 %v62
    %v137 = vunpack.c.h.b16 %v62
    %v138 = vunpack.c.l.b16 %v63
    %v139 = vunpack.c.l.b16 %v64
    %v140 = vunpack.c.h.b16 %v64
    %v141 = vunpack.c.l.b16 %v65
    %v142 = vunpack.c.l.b16 %v66
    %v143 = vunpack.c.h.b16 %v66
    %v144 = vunpack.c.l.b16 %v67
    %v145 = vunpack.c.l.b16 %v68
    %v146 = vunpack.c.h.b16 %v68
    %v147 = vunpack.c.l.b16 %v69
    %v148 = vunpack.c.l.b16 %v70
    %v149 = vunpack.c.h.b16 %v70
    %v150 = vunpack.c.l.b16 %v71
    %v151 = vunpack.c.l.b16 %v72
    %v152 = vunpack.c.h.b16 %v72
    %v153 = vunpack.c.l.b16 %v73
    %v154 = vunpack.c.l.b16 %v74
    %v155 = vunpack.c.h.b16 %v74
    %v156 = vunpack.c.l.b16 %v75
    %v157 = vunpack.c.l.b16 %v76
    %v158 = vunpack.c.h.b16 %v76
    %v159 = vunpack.c.l.b16 %v77
    %v160 = vunpack.c.l.b16 %v78
    %v161 = vunpack.c.h.b16 %v78
    %v162 = vunpack.c.l.b16 %v79
    %v163 = vunpack.c.l.b16 %v80
    %v164 = vunpack.c.h.b16 %v80
    %v165 = vunpack.c.l.b16 %v81
    %v166 = vunpack.c.l.b16 %v82
    %v167 = vunpack.c.h.b16 %v82
    %v168 = vunpack.c.l.b16 %v83
    %v169 = vunpack.c.l.b16 %v84
    %v170 = vunpack.c.h.b16 %v84
    %v171 = vunpack.c.l.b16 %v85
    %v172 = vunpack.c.l.b16 %v86
    %v173 = vunpack.c.h.b16 %v86
    %v174 = vunpack.c.l.b16 %v87
    %v175 = vpack.c.b16 %v130, %v127
    %v176 = vpack.c.b16 %v131, %v128
    %v177 = vpack.c.b16 %v132, %v129
    %v178 = vpack.c.b16 %v136, %v133
    %v179 = vpack.c.b16 %v137, %v134
    %v180 = vpack.c.b16 %v138, %v135
    %v181 = vpack.c.b16 %v142, %v139
    %v182 = vpack.c.b16 %v143, %v140
    %v183 = vpack.c.b16 %v144, %v141
    %v184 = vpack.c.b16 %v148, %v145
    %v185 = vpack.c.b16 %v149, %v146
    %v186 = vpack.c.b16 %v150, %v147
    %v187 = vpack.c.b16 %v154, %v151
    %v188 = vpack.c.b16 %v155, %v152
    %v189 = vpack.c.b16 %v156, %v153
    %v190 = vpack.c.b16 %v160, %v157
    %v191 = vpack.c.b16 %v161, %v158
    %v192 = vpack.c.b16 %v162, %v159
    %v193 = vpack.c.b16 %v166, %v163
    %v194 = vpack.c.b16 %v167, %v164
    %v195 = vpack.c.b16 %v168, %v165
    %v196 = vpack.c.b16 %v172, %v169
    %v197 = vpack.c.b16 %v173, %v170
    %v198 = vpack.c.b16 %v174, %v171
    %223 = vmatpush.bf16.msra.mxu0 %v196
    %224 = vmatpush.bf16.msra.mxu0 %v193
    %225 = vmatpush.bf16.msra.mxu0 %v190
    %226 = vmatpush.bf16.msra.mxu0 %v187
    %227 = vmatpush.bf16.msra.mxu0 %v184
    %228 = vmatpush.bf16.msra.mxu0 %v181
    %229 = vmatpush.bf16.msra.mxu0 %v178
    %230 = vmatpush.bf16.msra.mxu0 %v175
    %231 = vmatmul.bf16.gmra.mxu0 %v94
    %v232 = vpop.f32.mrf.mxu0
    %v233 = vadd.f32 0.0, %v232
    %v234 = vpop.f32.mrf.mxu0
    %235 = vdwg.mxu0
    %236 = vmatpush.bf16.msra.mxu0 %v197
    %237 = vmatpush.bf16.msra.mxu0 %v194
    %238 = vmatpush.bf16.msra.mxu0 %v191
    %239 = vmatpush.bf16.msra.mxu0 %v188
    %240 = vmatpush.bf16.msra.mxu0 %v185
    %241 = vmatpush.bf16.msra.mxu0 %v182
    %242 = vmatpush.bf16.msra.mxu0 %v179
    %243 = vmatpush.bf16.msra.mxu0 %v176
    %244 = vmatmul.bf16.gmra.mxu0 %v94
    %v245 = vpop.f32.mrf.mxu0
    %v246 = vadd.f32 0.0, %v245
    %v247 = vpop.f32.mrf.mxu0
    %248 = vdwg.mxu0
    %249 = vmatpush.bf16.msra.mxu0 %v198
    %250 = vmatpush.bf16.msra.mxu0 %v195
    %251 = vmatpush.bf16.msra.mxu0 %v192
    %252 = vmatpush.bf16.msra.mxu0 %v189
    %253 = vmatpush.bf16.msra.mxu0 %v186
    %254 = vmatpush.bf16.msra.mxu0 %v183
    %255 = vmatpush.bf16.msra.mxu0 %v180
    %256 = vmatpush.bf16.msra.mxu0 %v177
    %257 = vmatmul.bf16.gmra.mxu0 %v94
    %v258 = vpop.f32.mrf.mxu0
    %v259 = vadd.f32 0.0, %v258
    %v260 = vpop.f32.mrf.mxu0
    %261 = vdwg.mxu0
    %v262 = vadd.f32 %v91, %v233
    %v263 = vxor.u32 %v262, 2147483648
    %v264 = vmul.f32 %v263, 1.442695
    %v265 = vpow.pop %v264
    %v266 = vadd.f32 %v265, 1.0
    %v267 = vrcp.pop %v266
    %v268 = vmul.f32 %v266, %v267
    %v269 = vsub.f32 1.0, %v268
    %v270 = vmul.f32 %v267, %v269
    %v271 = vadd.f32 %v267, %v270
    %vm272 = vweird.f32 %v266
    %vm273 = vweird.f32 %v267
    %vm274 = vmor %vm272, %vm273
    %v275 = vsel %vm274, %v267, %v271
    %v276 = vand.u32 2147483647, %v266
    %vm277 = vcmp.eq.f32.partialorder %v276, 8.507059e+37
    %v278 = vand.u32 %v266, 2147483648
    %v279 = vor.u32 1.1754944e-38, %v278
    %v280 = vsel %vm277, %v279, %v275
    %v281 = vmul.f32 1.0, %v280
    %v282 = vadd.f32 %v92, %v246
    %v283 = vxor.u32 %v282, 2147483648
    %v284 = vmul.f32 %v283, 1.442695
    %v285 = vpow.pop %v284
    %v286 = vadd.f32 %v285, 1.0
    %v287 = vrcp.pop %v286
    %v288 = vmul.f32 %v286, %v287
    %v289 = vsub.f32 1.0, %v288
    %v290 = vmul.f32 %v287, %v289
    %v291 = vadd.f32 %v287, %v290
    %vm292 = vweird.f32 %v286
    %vm293 = vweird.f32 %v287
    %vm294 = vmor %vm292, %vm293
    %v295 = vsel %vm294, %v287, %v291
    %v296 = vand.u32 2147483647, %v286
    %vm297 = vcmp.eq.f32.partialorder %v296, 8.507059e+37
    %v298 = vand.u32 %v286, 2147483648
    %v299 = vor.u32 1.1754944e-38, %v298
    %v300 = vsel %vm297, %v299, %v295
    %v301 = vmul.f32 1.0, %v300
    %v302 = vadd.f32 %v259, %v54
    %v303 = vmul.f32 %v281, %v302
    %v304 = vadd.f32 %v93, %v303
    %v305 = vtanh.pop %v304
    %v306 = vsub.f32 %v88, %v305
    %v307 = vmul.f32 %v301, %v306
    %v308 = vadd.f32 %v305, %v307
    %s309 = scalar_lea.vmem [#allocation3], 12
    %v310 = vld [vmem:[%s309] sm:$0xff]
    %v311 = vld [vmem:[%s309 + $0x8] sm:$0xf]
    %v312 = vunpack.c.l.bf16 %v310
    %v313 = vunpack.c.h.bf16 %v310
    %v314 = vunpack.c.l.bf16 %v311
    %v315 = vpack.c.bf16 %v308, %v308
    %316 = vmatpush.bf16.msra.mxu0 %v196
    %317 = vmatpush.bf16.msra.mxu0 %v193
    %318 = vmatpush.bf16.msra.mxu0 %v190
    %319 = vmatpush.bf16.msra.mxu0 %v187
    %320 = vmatpush.bf16.msra.mxu0 %v184
    %321 = vmatpush.bf16.msra.mxu0 %v181
    %322 = vmatpush.bf16.msra.mxu0 %v178
    %323 = vmatpush.bf16.msra.mxu0 %v175
    %324 = vmatmul.bf16.gmra.mxu0 %v315
    %v325 = vpop.f32.mrf.mxu0
    %v326 = vadd.f32 0.0, %v325
    %v327 = vpop.f32.mrf.mxu0
    %328 = vdwg.mxu0
    %329 = vmatpush.bf16.msra.mxu0 %v197
    %330 = vmatpush.bf16.msra.mxu0 %v194
    %331 = vmatpush.bf16.msra.mxu0 %v191
    %332 = vmatpush.bf16.msra.mxu0 %v188
    %333 = vmatpush.bf16.msra.mxu0 %v185
    %334 = vmatpush.bf16.msra.mxu0 %v182
    %335 = vmatpush.bf16.msra.mxu0 %v179
    %336 = vmatpush.bf16.msra.mxu0 %v176
    %337 = vmatmul.bf16.gmra.mxu0 %v315
    %v338 = vpop.f32.mrf.mxu0
    %v339 = vadd.f32 0.0, %v338
    %v340 = vpop.f32.mrf.mxu0
    %341 = vdwg.mxu0
    %342 = vmatpush.bf16.msra.mxu0 %v198
    %343 = vmatpush.bf16.msra.mxu0 %v195
    %344 = vmatpush.bf16.msra.mxu0 %v192
    %345 = vmatpush.bf16.msra.mxu0 %v189
    %346 = vmatpush.bf16.msra.mxu0 %v186
    %347 = vmatpush.bf16.msra.mxu0 %v183
    %348 = vmatpush.bf16.msra.mxu0 %v180
    %349 = vmatpush.bf16.msra.mxu0 %v177
    %350 = vmatmul.bf16.gmra.mxu0 %v315
    %v351 = vpop.f32.mrf.mxu0
    %v352 = vadd.f32 0.0, %v351
    %v353 = vpop.f32.mrf.mxu0
    %354 = vdwg.mxu0
    %v355 = vadd.f32 %v312, %v326
    %v356 = vxor.u32 %v355, 2147483648
    %v357 = vmul.f32 %v356, 1.442695
    %v358 = vpow.pop %v357
    %v359 = vadd.f32 %v358, 1.0
    %v360 = vrcp.pop %v359
    %v361 = vmul.f32 %v359, %v360
    %v362 = vsub.f32 1.0, %v361
    %v363 = vmul.f32 %v360, %v362
    %v364 = vadd.f32 %v360, %v363
    %vm365 = vweird.f32 %v359
    %vm366 = vweird.f32 %v360
    %vm367 = vmor %vm365, %vm366
    %v368 = vsel %vm367, %v360, %v364
    %v369 = vand.u32 2147483647, %v359
    %vm370 = vcmp.eq.f32.partialorder %v369, 8.507059e+37
    %v371 = vand.u32 %v359, 2147483648
    %v372 = vor.u32 1.1754944e-38, %v371
    %v373 = vsel %vm370, %v372, %v368
    %v374 = vmul.f32 1.0, %v373
    %v375 = vadd.f32 %v313, %v339
    %v376 = vxor.u32 %v375, 2147483648
    %v377 = vmul.f32 %v376, 1.442695
    %v378 = vpow.pop %v377
    %v379 = vadd.f32 %v378, 1.0
    %v380 = vrcp.pop %v379
    %v381 = vmul.f32 %v379, %v380
    %v382 = vsub.f32 1.0, %v381
    %v383 = vmul.f32 %v380, %v382
    %v384 = vadd.f32 %v380, %v383
    %vm385 = vweird.f32 %v379
    %vm386 = vweird.f32 %v380
    %vm387 = vmor %vm385, %vm386
    %v388 = vsel %vm387, %v380, %v384
    %v389 = vand.u32 2147483647, %v379
    %vm390 = vcmp.eq.f32.partialorder %v389, 8.507059e+37
    %v391 = vand.u32 %v379, 2147483648
    %v392 = vor.u32 1.1754944e-38, %v391
    %v393 = vsel %vm390, %v392, %v388
    %v394 = vmul.f32 1.0, %v393
    %v395 = vadd.f32 %v352, %v54
    %v396 = vmul.f32 %v374, %v395
    %v397 = vadd.f32 %v314, %v396
    %v398 = vtanh.pop %v397
    %v399 = vsub.f32 %v308, %v398
    %v400 = vmul.f32 %v394, %v399
    %v401 = vadd.f32 %v398, %v400
    %s402 = scalar_lea.vmem [#allocation3], 24
    %v403 = vld [vmem:[%s402] sm:$0xff]
    %v404 = vld [vmem:[%s402 + $0x8] sm:$0xf]
    %v405 = vunpack.c.l.bf16 %v403
    %v406 = vunpack.c.h.bf16 %v403
    %v407 = vunpack.c.l.bf16 %v404
    %v408 = vpack.c.bf16 %v401, %v401
    %409 = vmatpush.bf16.msra.mxu0 %v196
    %410 = vmatpush.bf16.msra.mxu0 %v193
    %411 = vmatpush.bf16.msra.mxu0 %v190
    %412 = vmatpush.bf16.msra.mxu0 %v187
    %413 = vmatpush.bf16.msra.mxu0 %v184
    %414 = vmatpush.bf16.msra.mxu0 %v181
    %415 = vmatpush.bf16.msra.mxu0 %v178
    %416 = vmatpush.bf16.msra.mxu0 %v175
    %417 = vmatmul.bf16.gmra.mxu0 %v408
    %v418 = vpop.f32.mrf.mxu0
    %v419 = vadd.f32 0.0, %v418
    %v420 = vpop.f32.mrf.mxu0
    %421 = vdwg.mxu0
    %422 = vmatpush.bf16.msra.mxu0 %v197
    %423 = vmatpush.bf16.msra.mxu0 %v194
    %424 = vmatpush.bf16.msra.mxu0 %v191
    %425 = vmatpush.bf16.msra.mxu0 %v188
    %426 = vmatpush.bf16.msra.mxu0 %v185
    %427 = vmatpush.bf16.msra.mxu0 %v182
    %428 = vmatpush.bf16.msra.mxu0 %v179
    %429 = vmatpush.bf16.msra.mxu0 %v176
    %430 = vmatmul.bf16.gmra.mxu0 %v408
    %v431 = vpop.f32.mrf.mxu0
    %v432 = vadd.f32 0.0, %v431
    %v433 = vpop.f32.mrf.mxu0
    %434 = vdwg.mxu0
    %435 = vmatpush.bf16.msra.mxu0 %v198
    %436 = vmatpush.bf16.msra.mxu0 %v195
    %437 = vmatpush.bf16.msra.mxu0 %v192
    %438 = vmatpush.bf16.msra.mxu0 %v189
    %439 = vmatpush.bf16.msra.mxu0 %v186
    %440 = vmatpush.bf16.msra.mxu0 %v183
    %441 = vmatpush.bf16.msra.mxu0 %v180
    %442 = vmatpush.bf16.msra.mxu0 %v177
    %443 = vmatmul.bf16.gmra.mxu0 %v408
    %v444 = vpop.f32.mrf.mxu0
    %v445 = vadd.f32 0.0, %v444
    %v446 = vpop.f32.mrf.mxu0
    %447 = vdwg.mxu0
    %v448 = vadd.f32 %v405, %v419
    %v449 = vxor.u32 %v448, 2147483648
    %v450 = vmul.f32 %v449, 1.442695
    %v451 = vpow.pop %v450
    %v452 = vadd.f32 %v451, 1.0
    %v453 = vrcp.pop %v452
    %v454 = vmul.f32 %v452, %v453
    %v455 = vsub.f32 1.0, %v454
    %v456 = vmul.f32 %v453, %v455
    %v457 = vadd.f32 %v453, %v456
    %vm458 = vweird.f32 %v452
    %vm459 = vweird.f32 %v453
    %vm460 = vmor %vm458, %vm459
    %v461 = vsel %vm460, %v453, %v457
    %v462 = vand.u32 2147483647, %v452
    %vm463 = vcmp.eq.f32.partialorder %v462, 8.507059e+37
    %v464 = vand.u32 %v452, 2147483648
    %v465 = vor.u32 1.1754944e-38, %v464
    %v466 = vsel %vm463, %v465, %v461
    %v467 = vmul.f32 1.0, %v466
    %v468 = vadd.f32 %v406, %v432
    %v469 = vxor.u32 %v468, 2147483648
    %v470 = vmul.f32 %v469, 1.442695
    %v471 = vpow.pop %v470
    %v472 = vadd.f32 %v471, 1.0
    %v473 = vrcp.pop %v472
    %v474 = vmul.f32 %v472, %v473
    %v475 = vsub.f32 1.0, %v474
    %v476 = vmul.f32 %v473, %v475
    %v477 = vadd.f32 %v473, %v476
    %vm478 = vweird.f32 %v472
    %vm479 = vweird.f32 %v473
    %vm480 = vmor %vm478, %vm479
    %v481 = vsel %vm480, %v473, %v477
    %v482 = vand.u32 2147483647, %v472
    %vm483 = vcmp.eq.f32.partialorder %v482, 8.507059e+37
    %v484 = vand.u32 %v472, 2147483648
    %v485 = vor.u32 1.1754944e-38, %v484
    %v486 = vsel %vm483, %v485, %v481
    %v487 = vmul.f32 1.0, %v486
    %v488 = vadd.f32 %v445, %v54
    %v489 = vmul.f32 %v467, %v488
    %v490 = vadd.f32 %v407, %v489
    %v491 = vtanh.pop %v490
    %v492 = vsub.f32 %v401, %v491
    %v493 = vmul.f32 %v487, %v492
    %v494 = vadd.f32 %v491, %v493
    %s495 = scalar_lea.vmem [#allocation3], 36
    %v496 = vld [vmem:[%s495] sm:$0xff]
    %v497 = vld [vmem:[%s495 + $0x8] sm:$0xf]
    %v498 = vunpack.c.l.bf16 %v496
    %v499 = vunpack.c.h.bf16 %v496
    %v500 = vunpack.c.l.bf16 %v497
    %v501 = vpack.c.bf16 %v494, %v494
    %502 = vmatpush.bf16.msra.mxu0 %v196
    %503 = vmatpush.bf16.msra.mxu0 %v193
    %504 = vmatpush.bf16.msra.mxu0 %v190
    %505 = vmatpush.bf16.msra.mxu0 %v187
    %506 = vmatpush.bf16.msra.mxu0 %v184
    %507 = vmatpush.bf16.msra.mxu0 %v181
    %508 = vmatpush.bf16.msra.mxu0 %v178
    %509 = vmatpush.bf16.msra.mxu0 %v175
    %510 = vmatmul.bf16.gmra.mxu0 %v501
    %v511 = vpop.f32.mrf.mxu0
    %v512 = vadd.f32 0.0, %v511
    %v513 = vpop.f32.mrf.mxu0
    %514 = vdwg.mxu0
    %515 = vmatpush.bf16.msra.mxu0 %v197
    %516 = vmatpush.bf16.msra.mxu0 %v194
    %517 = vmatpush.bf16.msra.mxu0 %v191
    %518 = vmatpush.bf16.msra.mxu0 %v188
    %519 = vmatpush.bf16.msra.mxu0 %v185
    %520 = vmatpush.bf16.msra.mxu0 %v182
    %521 = vmatpush.bf16.msra.mxu0 %v179
    %522 = vmatpush.bf16.msra.mxu0 %v176
    %523 = vmatmul.bf16.gmra.mxu0 %v501
    %v524 = vpop.f32.mrf.mxu0
    %v525 = vadd.f32 0.0, %v524
    %v526 = vpop.f32.mrf.mxu0
    %527 = vdwg.mxu0
    %528 = vmatpush.bf16.msra.mxu0 %v198
    %529 = vmatpush.bf16.msra.mxu0 %v195
    %530 = vmatpush.bf16.msra.mxu0 %v192
    %531 = vmatpush.bf16.msra.mxu0 %v189
    %532 = vmatpush.bf16.msra.mxu0 %v186
    %533 = vmatpush.bf16.msra.mxu0 %v183
    %534 = vmatpush.bf16.msra.mxu0 %v180
    %535 = vmatpush.bf16.msra.mxu0 %v177
    %536 = vmatmul.bf16.gmra.mxu0 %v501
    %v537 = vpop.f32.mrf.mxu0
    %v538 = vadd.f32 0.0, %v537
    %v539 = vpop.f32.mrf.mxu0
    %540 = vdwg.mxu0
    %v541 = vadd.f32 %v498, %v512
    %v542 = vxor.u32 %v541, 2147483648
    %v543 = vmul.f32 %v542, 1.442695
    %v544 = vpow.pop %v543
    %v545 = vadd.f32 %v544, 1.0
    %v546 = vrcp.pop %v545
    %v547 = vmul.f32 %v545, %v546
    %v548 = vsub.f32 1.0, %v547
    %v549 = vmul.f32 %v546, %v548
    %v550 = vadd.f32 %v546, %v549
    %vm551 = vweird.f32 %v545
    %vm552 = vweird.f32 %v546
    %vm553 = vmor %vm551, %vm552
    %v554 = vsel %vm553, %v546, %v550
    %v555 = vand.u32 2147483647, %v545
    %vm556 = vcmp.eq.f32.partialorder %v555, 8.507059e+37
    %v557 = vand.u32 %v545, 2147483648
    %v558 = vor.u32 1.1754944e-38, %v557
    %v559 = vsel %vm556, %v558, %v554
    %v560 = vmul.f32 1.0, %v559
    %v561 = vadd.f32 %v499, %v525
    %v562 = vxor.u32 %v561, 2147483648
    %v563 = vmul.f32 %v562, 1.442695
    %v564 = vpow.pop %v563
    %v565 = vadd.f32 %v564, 1.0
    %v566 = vrcp.pop %v565
    %v567 = vmul.f32 %v565, %v566
    %v568 = vsub.f32 1.0, %v567
    %v569 = vmul.f32 %v566, %v568
    %v570 = vadd.f32 %v566, %v569
    %vm571 = vweird.f32 %v565
    %vm572 = vweird.f32 %v566
    %vm573 = vmor %vm571, %vm572
    %v574 = vsel %vm573, %v566, %v570
    %v575 = vand.u32 2147483647, %v565
    %vm576 = vcmp.eq.f32.partialorder %v575, 8.507059e+37
    %v577 = vand.u32 %v565, 2147483648
    %v578 = vor.u32 1.1754944e-38, %v577
    %v579 = vsel %vm576, %v578, %v574
    %v580 = vmul.f32 1.0, %v579
    %v581 = vadd.f32 %v538, %v54
    %v582 = vmul.f32 %v560, %v581
    %v583 = vadd.f32 %v500, %v582
    %v584 = vtanh.pop %v583
    %v585 = vsub.f32 %v494, %v584
    %v586 = vmul.f32 %v580, %v585
    %v587 = vadd.f32 %v584, %v586
    %s588 = scalar_lea.vmem [#allocation3], 48
    %v589 = vld [vmem:[%s588] sm:$0xff]
    %v590 = vld [vmem:[%s588 + $0x8] sm:$0xf]
    %v591 = vunpack.c.l.bf16 %v589
    %v592 = vunpack.c.h.bf16 %v589
    %v593 = vunpack.c.l.bf16 %v590
    %v594 = vpack.c.bf16 %v587, %v587
    %595 = vmatpush.bf16.msra.mxu0 %v196
    %596 = vmatpush.bf16.msra.mxu0 %v193
    %597 = vmatpush.bf16.msra.mxu0 %v190
    %598 = vmatpush.bf16.msra.mxu0 %v187
    %599 = vmatpush.bf16.msra.mxu0 %v184
    %600 = vmatpush.bf16.msra.mxu0 %v181
    %601 = vmatpush.bf16.msra.mxu0 %v178
    %602 = vmatpush.bf16.msra.mxu0 %v175
    %603 = vmatmul.bf16.gmra.mxu0 %v594
    %v604 = vpop.f32.mrf.mxu0
    %v605 = vadd.f32 0.0, %v604
    %v606 = vpop.f32.mrf.mxu0
    %607 = vdwg.mxu0
    %608 = vmatpush.bf16.msra.mxu0 %v197
    %609 = vmatpush.bf16.msra.mxu0 %v194
    %610 = vmatpush.bf16.msra.mxu0 %v191
    %611 = vmatpush.bf16.msra.mxu0 %v188
    %612 = vmatpush.bf16.msra.mxu0 %v185
    %613 = vmatpush.bf16.msra.mxu0 %v182
    %614 = vmatpush.bf16.msra.mxu0 %v179
    %615 = vmatpush.bf16.msra.mxu0 %v176
    %616 = vmatmul.bf16.gmra.mxu0 %v594
    %v617 = vpop.f32.mrf.mxu0
    %v618 = vadd.f32 0.0, %v617
    %v619 = vpop.f32.mrf.mxu0
    %620 = vdwg.mxu0
    %621 = vmatpush.bf16.msra.mxu0 %v198
    %622 = vmatpush.bf16.msra.mxu0 %v195
    %623 = vmatpush.bf16.msra.mxu0 %v192
    %624 = vmatpush.bf16.msra.mxu0 %v189
    %625 = vmatpush.bf16.msra.mxu0 %v186
    %626 = vmatpush.bf16.msra.mxu0 %v183
    %627 = vmatpush.bf16.msra.mxu0 %v180
    %628 = vmatpush.bf16.msra.mxu0 %v177
    %629 = vmatmul.bf16.gmra.mxu0 %v594
    %v630 = vpop.f32.mrf.mxu0
    %v631 = vadd.f32 0.0, %v630
    %v632 = vpop.f32.mrf.mxu0
    %633 = vdwg.mxu0
    %v634 = vadd.f32 %v591, %v605
    %v635 = vxor.u32 %v634, 2147483648
    %v636 = vmul.f32 %v635, 1.442695
    %v637 = vpow.pop %v636
    %v638 = vadd.f32 %v637, 1.0
    %v639 = vrcp.pop %v638
    %v640 = vmul.f32 %v638, %v639
    %v641 = vsub.f32 1.0, %v640
    %v642 = vmul.f32 %v639, %v641
    %v643 = vadd.f32 %v639, %v642
    %vm644 = vweird.f32 %v638
    %vm645 = vweird.f32 %v639
    %vm646 = vmor %vm644, %vm645
    %v647 = vsel %vm646, %v639, %v643
    %v648 = vand.u32 2147483647, %v638
    %vm649 = vcmp.eq.f32.partialorder %v648, 8.507059e+37
    %v650 = vand.u32 %v638, 2147483648
    %v651 = vor.u32 1.1754944e-38, %v650
    %v652 = vsel %vm649, %v651, %v647
    %v653 = vmul.f32 1.0, %v652
    %v654 = vadd.f32 %v592, %v618
    %v655 = vxor.u32 %v654, 2147483648
    %v656 = vmul.f32 %v655, 1.442695
    %v657 = vpow.pop %v656
    %v658 = vadd.f32 %v657, 1.0
    %v659 = vrcp.pop %v658
    %v660 = vmul.f32 %v658, %v659
    %v661 = vsub.f32 1.0, %v660
    %v662 = vmul.f32 %v659, %v661
    %v663 = vadd.f32 %v659, %v662
    %vm664 = vweird.f32 %v658
    %vm665 = vweird.f32 %v659
    %vm666 = vmor %vm664, %vm665
    %v667 = vsel %vm666, %v659, %v663
    %v668 = vand.u32 2147483647, %v658
    %vm669 = vcmp.eq.f32.partialorder %v668, 8.507059e+37
    %v670 = vand.u32 %v658, 2147483648
    %v671 = vor.u32 1.1754944e-38, %v670
    %v672 = vsel %vm669, %v671, %v667
    %v673 = vmul.f32 1.0, %v672
    %v674 = vadd.f32 %v631, %v54
    %v675 = vmul.f32 %v653, %v674
    %v676 = vadd.f32 %v593, %v675
    %v677 = vtanh.pop %v676
    %v678 = vsub.f32 %v587, %v677
    %v679 = vmul.f32 %v673, %v678
    %v680 = vadd.f32 %v677, %v679
    %s681 = scalar_lea.vmem [#allocation3], 60
    %v682 = vld [vmem:[%s681] sm:$0xff]
    %v683 = vld [vmem:[%s681 + $0x8] sm:$0xf]
    %v684 = vunpack.c.l.bf16 %v682
    %v685 = vunpack.c.h.bf16 %v682
    %v686 = vunpack.c.l.bf16 %v683
    %v687 = vpack.c.bf16 %v680, %v680
    %688 = vmatpush.bf16.msra.mxu0 %v196
    %689 = vmatpush.bf16.msra.mxu0 %v193
    %690 = vmatpush.bf16.msra.mxu0 %v190
    %691 = vmatpush.bf16.msra.mxu0 %v187
    %692 = vmatpush.bf16.msra.mxu0 %v184
    %693 = vmatpush.bf16.msra.mxu0 %v181
    %694 = vmatpush.bf16.msra.mxu0 %v178
    %695 = vmatpush.bf16.msra.mxu0 %v175
    %696 = vmatmul.bf16.gmra.mxu0 %v687
    %v697 = vpop.f32.mrf.mxu0
    %v698 = vadd.f32 0.0, %v697
    %v699 = vpop.f32.mrf.mxu0
    %700 = vdwg.mxu0
    %701 = vmatpush.bf16.msra.mxu0 %v197
    %702 = vmatpush.bf16.msra.mxu0 %v194
    %703 = vmatpush.bf16.msra.mxu0 %v191
    %704 = vmatpush.bf16.msra.mxu0 %v188
    %705 = vmatpush.bf16.msra.mxu0 %v185
    %706 = vmatpush.bf16.msra.mxu0 %v182
    %707 = vmatpush.bf16.msra.mxu0 %v179
    %708 = vmatpush.bf16.msra.mxu0 %v176
    %709 = vmatmul.bf16.gmra.mxu0 %v687
    %v710 = vpop.f32.mrf.mxu0
    %v711 = vadd.f32 0.0, %v710
    %v712 = vpop.f32.mrf.mxu0
    %713 = vdwg.mxu0
    %714 = vmatpush.bf16.msra.mxu0 %v198
    %715 = vmatpush.bf16.msra.mxu0 %v195
    %716 = vmatpush.bf16.msra.mxu0 %v192
    %717 = vmatpush.bf16.msra.mxu0 %v189
    %718 = vmatpush.bf16.msra.mxu0 %v186
    %719 = vmatpush.bf16.msra.mxu0 %v183
    %720 = vmatpush.bf16.msra.mxu0 %v180
    %721 = vmatpush.bf16.msra.mxu0 %v177
    %722 = vmatmul.bf16.gmra.mxu0 %v687
    %v723 = vpop.f32.mrf.mxu0
    %v724 = vadd.f32 0.0, %v723
    %v725 = vpop.f32.mrf.mxu0
    %726 = vdwg.mxu0
    %v727 = vadd.f32 %v684, %v698
    %v728 = vxor.u32 %v727, 2147483648
    %v729 = vmul.f32 %v728, 1.442695
    %v730 = vpow.pop %v729
    %v731 = vadd.f32 %v730, 1.0
    %v732 = vrcp.pop %v731
    %v733 = vmul.f32 %v731, %v732
    %v734 = vsub.f32 1.0, %v733
    %v735 = vmul.f32 %v732, %v734
    %v736 = vadd.f32 %v732, %v735
    %vm737 = vweird.f32 %v731
    %vm738 = vweird.f32 %v732
    %vm739 = vmor %vm737, %vm738
    %v740 = vsel %vm739, %v732, %v736
    %v741 = vand.u32 2147483647, %v731
    %vm742 = vcmp.eq.f32.partialorder %v741, 8.507059e+37
    %v743 = vand.u32 %v731, 2147483648
    %v744 = vor.u32 1.1754944e-38, %v743
    %v745 = vsel %vm742, %v744, %v740
    %v746 = vmul.f32 1.0, %v745
    %v747 = vadd.f32 %v685, %v711
    %v748 = vxor.u32 %v747, 2147483648
    %v749 = vmul.f32 %v748, 1.442695
    %v750 = vpow.pop %v749
    %v751 = vadd.f32 %v750, 1.0
    %v752 = vrcp.pop %v751
    %v753 = vmul.f32 %v751, %v752
    %v754 = vsub.f32 1.0, %v753
    %v755 = vmul.f32 %v752, %v754
    %v756 = vadd.f32 %v752, %v755
    %vm757 = vweird.f32 %v751
    %vm758 = vweird.f32 %v752
    %vm759 = vmor %vm757, %vm758
    %v760 = vsel %vm759, %v752, %v756
    %v761 = vand.u32 2147483647, %v751
    %vm762 = vcmp.eq.f32.partialorder %v761, 8.507059e+37
    %v763 = vand.u32 %v751, 2147483648
    %v764 = vor.u32 1.1754944e-38, %v763
    %v765 = vsel %vm762, %v764, %v760
    %v766 = vmul.f32 1.0, %v765
    %v767 = vadd.f32 %v724, %v54
    %v768 = vmul.f32 %v746, %v767
    %v769 = vadd.f32 %v686, %v768
    %v770 = vtanh.pop %v769
    %v771 = vsub.f32 %v680, %v770
    %v772 = vmul.f32 %v766, %v771
    %v773 = vadd.f32 %v770, %v772
    %s774 = scalar_lea.vmem [#allocation3], 72
    %v775 = vld [vmem:[%s774] sm:$0xff]
    %v776 = vld [vmem:[%s774 + $0x8] sm:$0xf]
    %v777 = vunpack.c.l.bf16 %v775
    %v778 = vunpack.c.h.bf16 %v775
    %v779 = vunpack.c.l.bf16 %v776
    %v780 = vpack.c.bf16 %v773, %v773
    %781 = vmatpush.bf16.msra.mxu0 %v196
    %782 = vmatpush.bf16.msra.mxu0 %v193
    %783 = vmatpush.bf16.msra.mxu0 %v190
    %784 = vmatpush.bf16.msra.mxu0 %v187
    %785 = vmatpush.bf16.msra.mxu0 %v184
    %786 = vmatpush.bf16.msra.mxu0 %v181
    %787 = vmatpush.bf16.msra.mxu0 %v178
    %788 = vmatpush.bf16.msra.mxu0 %v175
    %789 = vmatmul.bf16.gmra.mxu0 %v780
    %v790 = vpop.f32.mrf.mxu0
    %v791 = vadd.f32 0.0, %v790
    %v792 = vpop.f32.mrf.mxu0
    %793 = vdwg.mxu0
    %794 = vmatpush.bf16.msra.mxu0 %v197
    %795 = vmatpush.bf16.msra.mxu0 %v194
    %796 = vmatpush.bf16.msra.mxu0 %v191
    %797 = vmatpush.bf16.msra.mxu0 %v188
    %798 = vmatpush.bf16.msra.mxu0 %v185
    %799 = vmatpush.bf16.msra.mxu0 %v182
    %800 = vmatpush.bf16.msra.mxu0 %v179
    %801 = vmatpush.bf16.msra.mxu0 %v176
    %802 = vmatmul.bf16.gmra.mxu0 %v780
    %v803 = vpop.f32.mrf.mxu0
    %v804 = vadd.f32 0.0, %v803
    %v805 = vpop.f32.mrf.mxu0
    %806 = vdwg.mxu0
    %807 = vmatpush.bf16.msra.mxu0 %v198
    %808 = vmatpush.bf16.msra.mxu0 %v195
    %809 = vmatpush.bf16.msra.mxu0 %v192
    %810 = vmatpush.bf16.msra.mxu0 %v189
    %811 = vmatpush.bf16.msra.mxu0 %v186
    %812 = vmatpush.bf16.msra.mxu0 %v183
    %813 = vmatpush.bf16.msra.mxu0 %v180
    %814 = vmatpush.bf16.msra.mxu0 %v177
    %815 = vmatmul.bf16.gmra.mxu0 %v780
    %v816 = vpop.f32.mrf.mxu0
    %v817 = vadd.f32 0.0, %v816
    %v818 = vpop.f32.mrf.mxu0
    %819 = vdwg.mxu0
    %v820 = vadd.f32 %v777, %v791
    %v821 = vxor.u32 %v820, 2147483648
    %v822 = vmul.f32 %v821, 1.442695
    %v823 = vpow.pop %v822
    %v824 = vadd.f32 %v823, 1.0
    %v825 = vrcp.pop %v824
    %v826 = vmul.f32 %v824, %v825
    %v827 = vsub.f32 1.0, %v826
    %v828 = vmul.f32 %v825, %v827
    %v829 = vadd.f32 %v825, %v828
    %vm830 = vweird.f32 %v824
    %vm831 = vweird.f32 %v825
    %vm832 = vmor %vm830, %vm831
    %v833 = vsel %vm832, %v825, %v829
    %v834 = vand.u32 2147483647, %v824
    %vm835 = vcmp.eq.f32.partialorder %v834, 8.507059e+37
    %v836 = vand.u32 %v824, 2147483648
    %v837 = vor.u32 1.1754944e-38, %v836
    %v838 = vsel %vm835, %v837, %v833
    %v839 = vmul.f32 1.0, %v838
    %v840 = vadd.f32 %v778, %v804
    %v841 = vxor.u32 %v840, 2147483648
    %v842 = vmul.f32 %v841, 1.442695
    %v843 = vpow.pop %v842
    %v844 = vadd.f32 %v843, 1.0
    %v845 = vrcp.pop %v844
    %v846 = vmul.f32 %v844, %v845
    %v847 = vsub.f32 1.0, %v846
    %v848 = vmul.f32 %v845, %v847
    %v849 = vadd.f32 %v845, %v848
    %vm850 = vweird.f32 %v844
    %vm851 = vweird.f32 %v845
    %vm852 = vmor %vm850, %vm851
    %v853 = vsel %vm852, %v845, %v849
    %v854 = vand.u32 2147483647, %v844
    %vm855 = vcmp.eq.f32.partialorder %v854, 8.507059e+37
    %v856 = vand.u32 %v844, 2147483648
    %v857 = vor.u32 1.1754944e-38, %v856
    %v858 = vsel %vm855, %v857, %v853
    %v859 = vmul.f32 1.0, %v858
    %v860 = vadd.f32 %v817, %v54
    %v861 = vmul.f32 %v839, %v860
    %v862 = vadd.f32 %v779, %v861
    %v863 = vtanh.pop %v862
    %v864 = vsub.f32 %v773, %v863
    %v865 = vmul.f32 %v859, %v864
    %v866 = vadd.f32 %v863, %v865
    %s867 = scalar_lea.vmem [#allocation3], 84
    %v868 = vld [vmem:[%s867] sm:$0xff]
    %v869 = vld [vmem:[%s867 + $0x8] sm:$0xf]
    %v870 = vunpack.c.l.bf16 %v868
    %v871 = vunpack.c.h.bf16 %v868
    %v872 = vunpack.c.l.bf16 %v869
    %v873 = vpack.c.bf16 %v866, %v866
    %874 = vmatpush.bf16.msra.mxu0 %v196
    %875 = vmatpush.bf16.msra.mxu0 %v193
    %876 = vmatpush.bf16.msra.mxu0 %v190
    %877 = vmatpush.bf16.msra.mxu0 %v187
    %878 = vmatpush.bf16.msra.mxu0 %v184
    %879 = vmatpush.bf16.msra.mxu0 %v181
    %880 = vmatpush.bf16.msra.mxu0 %v178
    %881 = vmatpush.bf16.msra.mxu0 %v175
    %882 = vmatmul.bf16.gmra.mxu0 %v873
    %v883 = vpop.f32.mrf.mxu0
    %v884 = vadd.f32 0.0, %v883
    %v885 = vpop.f32.mrf.mxu0
    %886 = vdwg.mxu0
    %887 = vmatpush.bf16.msra.mxu0 %v197
    %888 = vmatpush.bf16.msra.mxu0 %v194
    %889 = vmatpush.bf16.msra.mxu0 %v191
    %890 = vmatpush.bf16.msra.mxu0 %v188
    %891 = vmatpush.bf16.msra.mxu0 %v185
    %892 = vmatpush.bf16.msra.mxu0 %v182
    %893 = vmatpush.bf16.msra.mxu0 %v179
    %894 = vmatpush.bf16.msra.mxu0 %v176
    %895 = vmatmul.bf16.gmra.mxu0 %v873
    %v896 = vpop.f32.mrf.mxu0
    %v897 = vadd.f32 0.0, %v896
    %v898 = vpop.f32.mrf.mxu0
    %899 = vdwg.mxu0
    %900 = vmatpush.bf16.msra.mxu0 %v198
    %901 = vmatpush.bf16.msra.mxu0 %v195
    %902 = vmatpush.bf16.msra.mxu0 %v192
    %903 = vmatpush.bf16.msra.mxu0 %v189
    %904 = vmatpush.bf16.msra.mxu0 %v186
    %905 = vmatpush.bf16.msra.mxu0 %v183
    %906 = vmatpush.bf16.msra.mxu0 %v180
    %907 = vmatpush.bf16.msra.mxu0 %v177
    %908 = vmatmul.bf16.gmra.mxu0 %v873
    %v909 = vpop.f32.mrf.mxu0
    %v910 = vadd.f32 0.0, %v909
    %v911 = vpop.f32.mrf.mxu0
    %912 = vdwg.mxu0
    %v913 = vadd.f32 %v870, %v884
    %v914 = vxor.u32 %v913, 2147483648
    %v915 = vmul.f32 %v914, 1.442695
    %v916 = vpow.pop %v915
    %v917 = vadd.f32 %v916, 1.0
    %v918 = vrcp.pop %v917
    %v919 = vmul.f32 %v917, %v918
    %v920 = vsub.f32 1.0, %v919
    %v921 = vmul.f32 %v918, %v920
    %v922 = vadd.f32 %v918, %v921
    %vm923 = vweird.f32 %v917
    %vm924 = vweird.f32 %v918
    %vm925 = vmor %vm923, %vm924
    %v926 = vsel %vm925, %v918, %v922
    %v927 = vand.u32 2147483647, %v917
    %vm928 = vcmp.eq.f32.partialorder %v927, 8.507059e+37
    %v929 = vand.u32 %v917, 2147483648
    %v930 = vor.u32 1.1754944e-38, %v929
    %v931 = vsel %vm928, %v930, %v926
    %v932 = vmul.f32 1.0, %v931
    %v933 = vadd.f32 %v871, %v897
    %v934 = vxor.u32 %v933, 2147483648
    %v935 = vmul.f32 %v934, 1.442695
    %v936 = vpow.pop %v935
    %v937 = vadd.f32 %v936, 1.0
    %v938 = vrcp.pop %v937
    %v939 = vmul.f32 %v937, %v938
    %v940 = vsub.f32 1.0, %v939
    %v941 = vmul.f32 %v938, %v940
    %v942 = vadd.f32 %v938, %v941
    %vm943 = vweird.f32 %v937
    %vm944 = vweird.f32 %v938
    %vm945 = vmor %vm943, %vm944
    %v946 = vsel %vm945, %v938, %v942
    %v947 = vand.u32 2147483647, %v937
    %vm948 = vcmp.eq.f32.partialorder %v947, 8.507059e+37
    %v949 = vand.u32 %v937, 2147483648
    %v950 = vor.u32 1.1754944e-38, %v949
    %v951 = vsel %vm948, %v950, %v946
    %v952 = vmul.f32 1.0, %v951
    %v953 = vadd.f32 %v910, %v54
    %v954 = vmul.f32 %v932, %v953
    %v955 = vadd.f32 %v872, %v954
    %v956 = vtanh.pop %v955
    %v957 = vsub.f32 %v866, %v956
    %v958 = vmul.f32 %v952, %v957
    %v959 = vadd.f32 %v956, %v958
    %960 = vst [vmem:[#allocation2] sm:$0xff] %v959
    // Predicated region
    $region26: #{tpu_custom_call.1} parent=1 // pred_check
      %p961 = pneg %p47
    $region27: #{tpu_custom_call.1} parent=1 // pred_check_branch
      %963 = sbr.rel (%p961) target = $region29
    $region28: #{tpu_custom_call.1} parent=1 // pred_region
      %v964 = vld [vmem:[#allocation2] sm:$0xff]
      %965 = vst [vmem:[#allocation8] sm:$0xff] %v964
    $region29: #{tpu_custom_call.1} parent=1 // pred_fallthru
      _
    // Predicated region
    $region30: #{tpu_custom_call.1} parent=1 // pred_check
      _
    $region31: #{tpu_custom_call.1} parent=1 // pred_check_branch
      %967 = sbr.rel (0) target = $region33
    $region32: #{tpu_custom_call.1} parent=1 // pred_region
      %969 = vsyncadd [#allocation5], 0
      %s971 = sshll.u32 [#allocation8], 4
      %s972 = int_to_ptr.vmem [resolvable:$true] %s971
      %s973 = sshll.u32 %s3, 4
      %s974 = int_to_ptr.hbm [resolvable:$true] %s973
      %976 = dma.vmem_to_hbm [thread:$0]  %s972, 128, %s974, [#allocation5]
    $region33: #{tpu_custom_call.1} parent=1 // pred_fallthru
      _
    // Predicated region
    $region34: #{tpu_custom_call.1} parent=1 // pred_check
      _
    $region35: #{tpu_custom_call.1} parent=1 // pred_check_branch
      %978 = sbr.rel (0) target = $region37
    $region36: #{tpu_custom_call.1} parent=1 // pred_region
      %980 = dma.done [#allocation5], 128
    $region37: #{tpu_custom_call.1} parent=1 // pred_fallthru
      _
    %981 = vsyncpa [#allocation4], 1
    %982 = vsyncpa [#allocation7], 1
    %983 = vsyncpa [#allocation5], 1

</llo_original>
